<compile_context>
chip_gen: v6e
topology: v6e:2x2x1
jax: 0.10.0
libtpu: 0.0.40
codegen_flags: <defaults>
</compile_context>

<pallas_src>
import functools
import math

import jax
import jax.numpy as jnp
from jax.experimental import pallas as pl
from jax.experimental.pallas import tpu as pltpu


# ----------------------- helpers -----------------------

def _vmem_limit_bytes():
    """Leave headroom under the chip's physical VMEM (v7x: 64 MiB/TC, else 128 MiB)."""
    try:
        cap = pltpu.get_tpu_info().vmem_capacity_bytes
    except Exception:
        cap = 64 << 20
    return min(int(cap) * 3 // 4, 100 << 20)


_VMEM_LIMIT = _vmem_limit_bytes()


def _pick_tile(dim, pref, align):
    """Largest tile <= pref that divides dim and is `align`-aligned; else full dim."""
    if dim <= pref:
        return dim
    t = (pref // align) * align
    while t >= align:
        if dim % t == 0:
            return t
        t -= align
    # TODO(synk): support non-divisible dims with pl.cdiv grids + masked last tiles;
    # refuse pathological fallbacks that would blow the VMEM budget.
    if dim * 4 > (8 << 20):
        raise ValueError(f"no aligned tile divides dim={dim}; add masked-tile support")
    return dim


# ----------------------- tiled linear (bias [+ GELU] [+ residual+LayerNorm]) -----------------------
# Single K step: BERT-size K (<= 4096) fits comfortably in VMEM as bf16 tiles,
# so there is no accumulator scratch and no K grid axis.
# TODO(synk): add a K-tiled accumulator path (pl.when init/finalize) for K > 4096.

def _linear_kernel(x_ref, w_ref, b_ref, o_ref, *, activation):
    acc = jnp.dot(x_ref[...], w_ref[...], preferred_element_type=jnp.float32)
    acc = acc + b_ref[...]
    if activation == "gelu":
        # tanh-approx GELU -> EUP (HF default is exact erf; small systematic delta)
        acc = jax.nn.gelu(acc, approximate=True)
    o_ref[...] = acc.astype(o_ref.dtype)


def _linear_res_ln_kernel(x_ref, w_ref, b_ref, r_ref, g_ref, bln_ref, o_ref, *, eps):
    acc = jnp.dot(x_ref[...], w_ref[...], preferred_element_type=jnp.float32)
    x = acc + b_ref[...] + r_ref[...].astype(jnp.float32)
    mu = jnp.mean(x, axis=-1, keepdims=True)
    xc = x - mu
    var = jnp.mean(xc * xc, axis=-1, keepdims=True)
    o_ref[...] = (xc * jax.lax.rsqrt(var + eps) * g_ref[...] + bln_ref[...]).astype(o_ref.dtype)


def pallas_linear(x, w, b, activation=None, residual=None, ln_g=None, ln_b=None,
                  ln_eps=1e-12):
    """x[M,K] @ w[K,N] + b, optional GELU, optional fused residual+LayerNorm.

    bf16 operands, f32 MXU accumulation, bf16 output.
    When `residual` is given, the residual-add + LayerNorm runs in the matmul
    epilogue (requires the output tile to span the full hidden dim N).
    """
    M, K = x.shape
    N = w.shape[1]
    assert K <= 4096, "TODO(synk): K-tiled accumulator path for large K"

    x = x.astype(jnp.bfloat16)
    w = w.astype(jnp.bfloat16)
    b2 = b.reshape(1, N).astype(jnp.float32)

    tm = _pick_tile(M, 256, 16)          # 16-aligned -> full bf16 sublane pairs
    fuse_ln = residual is not None
    tn = N if fuse_ln else _pick_tile(N, 256, 128)
    grid = (M // tm, N // tn)

    x_spec = pl.BlockSpec((tm, K), lambda i, j: (i, 0))
    w_spec = pl.BlockSpec((K, tn), lambda i, j: (0, j))
    b_spec = pl.BlockSpec((1, tn), lambda i, j: (0, j))
    o_spec = pl.BlockSpec((tm, tn), lambda i, j: (i, j))

    if fuse_ln:
        kernel = functools.partial(_linear_res_ln_kernel, eps=ln_eps)
        in_specs = [x_spec, w_spec, b_spec,
                    pl.BlockSpec((tm, N), lambda i, j: (i, 0)),
                    pl.BlockSpec((1, N), lambda i, j: (0, 0)),
                    pl.BlockSpec((1, N), lambda i, j: (0, 0))]
        args = (x, w, b2, residual.astype(jnp.bfloat16),
                ln_g.reshape(1, N).astype(jnp.float32),
                ln_b.reshape(1, N).astype(jnp.float32))
    else:
        kernel = functools.partial(_linear_kernel, activation=activation)
        in_specs = [x_spec, w_spec, b_spec]
        args = (x, w, b2)

    return pl.pallas_call(
        kernel,
        out_shape=jax.ShapeDtypeStruct((M, N), jnp.bfloat16),
        grid_spec=pltpu.PrefetchScalarGridSpec(
            num_scalar_prefetch=0, grid=grid,
            in_specs=in_specs, out_specs=o_spec),
        compiler_params=pltpu.CompilerParams(
            dimension_semantics=("parallel", "parallel"),
            vmem_limit_bytes=_VMEM_LIMIT),
    )(*args)


# ----------------------- standalone LayerNorm (embeddings only) -----------------------

def _ln_kernel(x_ref, g_ref, b_ref, o_ref, *, eps):
    x = x_ref[...].astype(jnp.float32)
    mu = jnp.mean(x, axis=-1, keepdims=True)
    xc = x - mu
    var = jnp.mean(xc * xc, axis=-1, keepdims=True)
    o_ref[...] = (xc * jax.lax.rsqrt(var + eps) * g_ref[...] + b_ref[...]).astype(o_ref.dtype)


def pallas_layernorm(x, g, b, eps=1e-12):
    M, H = x.shape
    tm = _pick_tile(M, 512, 8)
    g2 = g.reshape(1, H).astype(jnp.float32)
    b2 = b.reshape(1, H).astype(jnp.float32)
    kernel = functools.partial(_ln_kernel, eps=eps)
    return pl.pallas_call(
        kernel,
        out_shape=jax.ShapeDtypeStruct((M, H), jnp.bfloat16),
        grid_spec=pltpu.PrefetchScalarGridSpec(
            num_scalar_prefetch=0, grid=(M // tm,),
            in_specs=[pl.BlockSpec((tm, H), lambda i: (i, 0)),
                      pl.BlockSpec((1, H), lambda i: (0, 0)),
                      pl.BlockSpec((1, H), lambda i: (0, 0))],
            out_specs=pl.BlockSpec((tm, H), lambda i: (i, 0))),
        compiler_params=pltpu.CompilerParams(
            dimension_semantics=("parallel",),
            vmem_limit_bytes=_VMEM_LIMIT),
    )(x, g2, b2)


# ----------------------- attention kernel (fused QKV input, grouped head stores) -----------------------
# TODO(synk): for long sequences, switch to flash-style KV tiling (online softmax)
# instead of full-[tq, S] scores in VMEM.

def _attention_kernel(q_ref, k_ref, v_ref, m_ref, o_ref, *, nh, dh, scale, hpg):
    tq = q_ref.shape[0]
    S = k_ref.shape[0]
    # Hoisted out of the head loop:
    #  - scale folded into Q ([tq,H] multiply instead of per-head [tq,S])
    #  - mask broadcast done once (JAX does not CSE broadcast_in_dim)
    q = (q_ref[...].astype(jnp.float32) * scale).astype(jnp.bfloat16)      # [tq, H]
    mb = jnp.broadcast_to(m_ref[...].astype(jnp.float32), (tq, S))         # [tq, S]

    n_groups = nh // hpg
    for g in range(n_groups):
        ctxs = []
        for hh in range(hpg):
            h = g * hpg + hh
            lo = h * dh
            qh = q[:, lo:lo + dh]                  # [tq, dh] bf16 (scaled)
            kh = k_ref[:, lo:lo + dh]              # [S, dh]  bf16
            vh = v_ref[:, lo:lo + dh]              # [S, dh]  bf16
            # Q @ K^T without an explicit transpose: contract the last dims.
            s = jax.lax.dot_general(qh, kh, (((1,), (1,)), ((), ())),
                                    preferred_element_type=jnp.float32) + mb
            s = s - jnp.max(s, axis=-1, keepdims=True)
            p = jnp.exp(s)
            p = p * pl.reciprocal(jnp.sum(p, axis=-1, keepdims=True), approx=True)
            ctxs.append(jnp.dot(p.astype(jnp.bfloat16), vh,
                                preferred_element_type=jnp.float32))
        blk = ctxs[0] if hpg == 1 else jnp.concatenate(ctxs, axis=-1)
        # One lane-dense (<= 128-wide) store per head group; bounds live ranges.
        o_ref[:, g * hpg * dh:(g + 1) * hpg * dh] = blk.astype(o_ref.dtype)


def pallas_attention(qkv, ext_mask, nh):
    """qkv: [B, S, 3H] bf16 (fused Q|K|V), ext_mask: [B, 1, S] additive f32 -> [B, S, H] bf16."""
    B, S, H3 = qkv.shape
    H = H3 // 3
    dh = H // nh
    scale = 1.0 / math.sqrt(dh)

    # Process enough heads per store to fill a 128-lane slab when possible.
    hpg = 1
    if dh < 128 and 128 % dh == 0:
        hpg = 128 // dh
        while hpg > 1 and nh % hpg != 0:
            hpg //= 2

    tq = _pick_tile(S, 256, 8)
    grid = (B, S // tq)
    kernel = functools.partial(_attention_kernel, nh=nh, dh=dh, scale=scale, hpg=hpg)

    # Three BlockSpec views onto the SAME fused qkv array (no HBM slicing in the wrapper):
    # last-axis block index 0/1/2 selects the Q/K/V column ranges.
    q_spec = pl.BlockSpec((None, tq, H), lambda b, qi: (b, qi, 0))
    k_spec = pl.BlockSpec((None, S, H), lambda b, qi: (b, 0, 1))
    v_spec = pl.BlockSpec((None, S, H), lambda b, qi: (b, 0, 2))
    m_spec = pl.BlockSpec((None, 1, S), lambda b, qi: (b, 0, 0))
    o_spec = pl.BlockSpec((None, tq, H), lambda b, qi: (b, qi, 0))

    return pl.pallas_call(
        kernel,
        out_shape=jax.ShapeDtypeStruct((B, S, H), jnp.bfloat16),
        grid_spec=pltpu.PrefetchScalarGridSpec(
            num_scalar_prefetch=0, grid=grid,
            in_specs=[q_spec, k_spec, v_spec, m_spec],
            out_specs=o_spec),
        compiler_params=pltpu.CompilerParams(
            dimension_semantics=("parallel", "parallel"),
            vmem_limit_bytes=_VMEM_LIMIT),
    )(qkv, qkv, qkv, ext_mask)


# ----------------------- pairwise-cosine-over-CLS kernel -----------------------

def _cosine_kernel(x_ref, o_ref, *, L, B, n_pairs):
    x = x_ref[...].astype(jnp.float32)                    # [L*B, H]
    inv = jax.lax.rsqrt(jnp.sum(x * x, axis=-1, keepdims=True) + 1e-12)
    hn = x * inv
    # Gram matrix on the MXU: gram[r, s] = cosine(row_r, row_s)
    gram = jax.lax.dot_general(hn, hn, (((1,), (1,)), ((), ())),
                               preferred_element_type=jnp.float32)
    LB = L * B
    r = jax.lax.broadcasted_iota(jnp.int32, (LB, LB), 0)
    c = jax.lax.broadcasted_iota(jnp.int32, (LB, LB), 1)
    # keep pairs with the same batch element and strictly increasing layer index
    mask = jnp.logical_and((r % B) == (c % B), (r // B) < (c // B))
    total = jnp.sum(jnp.where(mask, gram, 0.0), keepdims=True)    # (1, 1)
    o_ref[...] = total / n_pairs


def pallas_pairwise_cosine(cls_stack):
    """cls_stack: [L, B, H] -> scalar  mean over layer-pairs of sum_b cosine."""
    L, B, H = cls_stack.shape
    LB = L * B
    n_pairs = L * (L - 1) // 2
    x = cls_stack.reshape(LB, H)
    kernel = functools.partial(_cosine_kernel, L=L, B=B, n_pairs=float(n_pairs))
    out = pl.pallas_call(
        kernel,
        out_shape=jax.ShapeDtypeStruct((1, 1), jnp.float32),
        in_specs=[pl.BlockSpec(memory_space=pltpu.MemorySpace.VMEM)],
        out_specs=pl.BlockSpec(memory_space=pltpu.MemorySpace.VMEM),
    )(x)
    return out[0, 0]


# ----------------------- synthetic BERT-style encoder -----------------------

def init_params(key, cfg):
    H, I = cfg["hidden"], cfg["inter"]
    keys = iter(jax.random.split(key, 64))

    def dense(kin, kout):
        # weights stored in bf16 (halves HBM->VMEM traffic; f32 accumulation on MXU)
        return (0.02 * jax.random.normal(next(keys), (kin, kout), jnp.float32)).astype(jnp.bfloat16)

    params = {
        "word_emb": 0.02 * jax.random.normal(next(keys), (cfg["vocab"], H), jnp.float32),
        "pos_emb": 0.02 * jax.random.normal(next(keys), (cfg["max_pos"], H), jnp.float32),
        "type_emb": 0.02 * jax.random.normal(next(keys), (cfg["type_vocab"], H), jnp.float32),
        "emb_ln_g": jnp.ones((H,), jnp.float32),
        "emb_ln_b": jnp.zeros((H,), jnp.float32),
        "layers": [],
    }
    for _ in range(cfg["layers"]):
        lp = {
            "wqkv": dense(H, 3 * H), "bqkv": jnp.zeros((3 * H,), jnp.float32),   # fused Q|K|V
            "wo": dense(H, H), "bo": jnp.zeros((H,), jnp.float32),
            "attn_ln_g": jnp.ones((H,), jnp.float32),
            "attn_ln_b": jnp.zeros((H,), jnp.float32),
            "w1": dense(H, I), "b1": jnp.zeros((I,), jnp.float32),
            "w2": dense(I, H), "b2": jnp.zeros((H,), jnp.float32),
            "ffn_ln_g": jnp.ones((H,), jnp.float32),
            "ffn_ln_b": jnp.zeros((H,), jnp.float32),
        }
        params["layers"].append(lp)
    return params


def bert_encoder_hidden_states(params, input_ids, attention_mask, token_type_ids, cfg):
    """Returns [embeddings_out, layer1_out, ..., layerL_out], each [B, S, H] bf16."""
    B, S = input_ids.shape
    H = cfg["hidden"]
    nh = cfg["heads"]

    # TODO(synk): embedding gathers stay in plain JAX (no simple Pallas equivalent).
    pos_ids = jnp.arange(S)
    emb = (params["word_emb"][input_ids]
           + params["pos_emb"][pos_ids][None, :, :]
           + params["type_emb"][token_type_ids])
    h2 = pallas_layernorm(emb.reshape(B * S, H), params["emb_ln_g"], params["emb_ln_b"])
    hidden_states = [h2.reshape(B, S, H)]

    # BERT-style additive mask: 0 where attended, -1e4 where masked.  [B, 1, S]
    ext_mask = (1.0 - attention_mask.astype(jnp.float32))[:, None, :] * -10000.0

    for lp in params["layers"]:
        x2 = h2                                                 # [B*S, H] bf16, layer input
        qkv = pallas_linear(x2, lp["wqkv"], lp["bqkv"])         # fused QKV: [B*S, 3H] bf16
        ctx = pallas_attention(qkv.reshape(B, S, 3 * H), ext_mask, nh)   # [B, S, H] bf16

        # attention output projection with fused bias + residual + LayerNorm epilogue
        h2 = pallas_linear(ctx.reshape(B * S, H), lp["wo"], lp["bo"],
                           residual=x2, ln_g=lp["attn_ln_g"], ln_b=lp["attn_ln_b"])

        inter = pallas_linear(h2, lp["w1"], lp["b1"], activation="gelu")   # fused bias+GELU
        # FFN down projection with fused bias + residual + LayerNorm epilogue
        h2 = pallas_linear(inter, lp["w2"], lp["b2"],
                           residual=h2, ln_g=lp["ffn_ln_g"], ln_b=lp["ffn_ln_b"])

        hidden_states.append(h2.reshape(B, S, H))

    return hidden_states


# ----------------------- Bert4cosine forward -----------------------

def bert4cosine_forward(params, inputs, cfg, split_layers):
    seq, label, attention_mask, token_type_ids = inputs  # label unused (matches reference)
    layers = cfg["layers"]

    hiddens = bert_encoder_hidden_states(params, seq, attention_mask, token_type_ids, cfg)

    if split_layers == layers:
        hidden_list = hiddens[1:]
    else:
        # Matches PyTorch reference: hiddens[(1 + l) * int(layers / split_layers)]
        assert layers % split_layers == 0
        hidden_list = [hiddens[(1 + l) * (layers // split_layers)] for l in range(split_layers)]

    # CLS token per selected layer -> [L, B, H]
    cls = jnp.stack([h[:, 0, :] for h in hidden_list], axis=0)

    # Pairwise cosine over layers, summed over batch, averaged over pairs.
    return pallas_pairwise_cosine(cls)


if __name__ == "__main__":
    cfg = dict(vocab=50, hidden=128, layers=4, heads=4, inter=512, max_pos=16, type_vocab=2)
    split_layers = 4   # == num layers -> uses hiddens[1:], 4 CLS vectors, 6 pairs
    B, S = 2, 8

    key = jax.random.PRNGKey(0)
    pkey, dkey = jax.random.split(key)
    params = init_params(pkey, cfg)

    k1, k2 = jax.random.split(dkey)
    seq = jax.random.randint(k1, (B, S), 0, cfg["vocab"], dtype=jnp.int32)
    label = jnp.zeros((B,), jnp.int32)          # unused by forward, kept for signature parity
    attention_mask = jnp.ones((B, S), jnp.int32)
    token_type_ids = jnp.zeros((B, S), jnp.int32)

    out = bert4cosine_forward(params, [seq, label, attention_mask, token_type_ids],
                              cfg, split_layers)
    jax.block_until_ready(out)
    assert out.shape == () and jnp.isfinite(out)
    print("KERNEL_OK")
</pallas_src>

<mosaic_0001>
module attributes {stable_mosaic.version = 11 : i64} {
  func.func @_ln_kernel(%arg0: i32, %arg1: memref<16x128xf32, #tpu.memory_space<vmem>>, %arg2: memref<1x128xf32, #tpu.memory_space<vmem>>, %arg3: memref<1x128xf32, #tpu.memory_space<vmem>>, %arg4: memref<16x128xbf16, #tpu.memory_space<vmem>>) attributes {dimension_semantics = [#tpu.dimension_semantics<parallel>], iteration_bounds = array<i64: 1>, scalar_prefetch = 0 : i64, scratch_operands = 0 : i64, tpu.core_type = #tpu.core_type<tc>, window_params = [{transform_indices = @transform_0, window_bounds = array<i64: 16, 128>}, {pipeline_mode = #tpu.pipeline_mode<synchronous>, transform_indices = @transform_1, window_bounds = array<i64: 1, 128>}, {pipeline_mode = #tpu.pipeline_mode<synchronous>, transform_indices = @transform_2, window_bounds = array<i64: 1, 128>}, {transform_indices = @transform_3, window_bounds = array<i64: 16, 128>}]} {
    %c0 = arith.constant 0 : index
    %c0_0 = arith.constant 0 : index
    %0 = vector.load %arg1[%c0, %c0_0] : memref<16x128xf32, #tpu.memory_space<vmem>>, vector<16x128xf32>
    %cst = arith.constant dense<0.000000e+00> : vector<16xf32>
    %1 = vector.multi_reduction <add>, %0, %cst [1] : vector<16x128xf32> to vector<16xf32>
    %2 = vector.shape_cast %1 : vector<16xf32> to vector<16x1xf32>
    %cst_1 = arith.constant 1.280000e+02 : f32
    %3 = vector.broadcast %cst_1 : f32 to vector<16x1xf32>
    %4 = arith.divf %2, %3 : vector<16x1xf32>
    %5 = vector.broadcast %4 : vector<16x1xf32> to vector<16x128xf32>
    %6 = arith.subf %0, %5 : vector<16x128xf32>
    %7 = arith.mulf %6, %6 : vector<16x128xf32>
    %cst_2 = arith.constant dense<0.000000e+00> : vector<16xf32>
    %8 = vector.multi_reduction <add>, %7, %cst_2 [1] : vector<16x128xf32> to vector<16xf32>
    %9 = vector.shape_cast %8 : vector<16xf32> to vector<16x1xf32>
    %cst_3 = arith.constant 1.280000e+02 : f32
    %10 = vector.broadcast %cst_3 : f32 to vector<16x1xf32>
    %11 = arith.divf %9, %10 : vector<16x1xf32>
    %cst_4 = arith.constant 9.99999996E-13 : f32
    %12 = vector.broadcast %cst_4 : f32 to vector<16x1xf32>
    %13 = arith.addf %11, %12 : vector<16x1xf32>
    %14 = math.rsqrt %13 : vector<16x1xf32>
    %15 = vector.broadcast %14 : vector<16x1xf32> to vector<16x128xf32>
    %16 = arith.mulf %6, %15 : vector<16x128xf32>
    %c0_5 = arith.constant 0 : index
    %c0_6 = arith.constant 0 : index
    %17 = vector.load %arg2[%c0_5, %c0_6] : memref<1x128xf32, #tpu.memory_space<vmem>>, vector<1x128xf32>
    %18 = vector.broadcast %17 : vector<1x128xf32> to vector<16x128xf32>
    %19 = arith.mulf %16, %18 : vector<16x128xf32>
    %c0_7 = arith.constant 0 : index
    %c0_8 = arith.constant 0 : index
    %20 = vector.load %arg3[%c0_7, %c0_8] : memref<1x128xf32, #tpu.memory_space<vmem>>, vector<1x128xf32>
    %21 = vector.broadcast %20 : vector<1x128xf32> to vector<16x128xf32>
    %22 = arith.addf %19, %21 : vector<16x128xf32>
    %23 = arith.truncf %22 : vector<16x128xf32> to vector<16x128xbf16>
    %c0_9 = arith.constant 0 : index
    %c0_10 = arith.constant 0 : index
    %24 = vector.load %arg4[%c0_9, %c0_10] : memref<16x128xbf16, #tpu.memory_space<vmem>>, vector<16x128xbf16>
    tpu.vector_store %arg4[%c0_9, %c0_10], %23 {strides = array<i32>} : memref<16x128xbf16, #tpu.memory_space<vmem>>, vector<16x128xbf16>,
    return
  }
  func.func @transform_0(%arg0: i32) -> (i32, i32) {
    %c0_i32 = arith.constant 0 : i32
    %c0_i32_0 = arith.constant 0 : i32
    return %arg0, %c0_i32 : i32, i32
  }
  func.func @transform_1(%arg0: i32) -> (i32, i32) {
    %c0_i32 = arith.constant 0 : i32
    %c0_i32_0 = arith.constant 0 : i32
    %c0_i32_1 = arith.constant 0 : i32
    return %c0_i32, %c0_i32_0 : i32, i32
  }
  func.func @transform_2(%arg0: i32) -> (i32, i32) {
    %c0_i32 = arith.constant 0 : i32
    %c0_i32_0 = arith.constant 0 : i32
    %c0_i32_1 = arith.constant 0 : i32
    return %c0_i32, %c0_i32_0 : i32, i32
  }
  func.func @transform_3(%arg0: i32) -> (i32, i32) {
    %c0_i32 = arith.constant 0 : i32
    %c0_i32_0 = arith.constant 0 : i32
    return %arg0, %c0_i32 : i32, i32
  }
}

</mosaic_0001>

<llo_original>
// kernel: tpu_custom_call.1
$region0: #{tpu_custom_call.1}
  #allocation0 [shape = 'u32[]', space=smem, size = 0x4, offset = 0x4, fixed_abs, tag = 'smem constant byte address 0x4 - core index']
  #allocation1 [shape = 'u32[144,128]{1,0:T(1,128)}', space=vmem, size = 0x12000, scoped, tag = 'internal scratch']
  %s0 = inlined_call_operand.hbm [shape: f32[16,128], index: 0, kind: input, shape index: {}]
  %s1 = inlined_call_operand.vmem [shape: f32[1,128], index: 1, kind: input, shape index: {}]
  %s2 = inlined_call_operand.vmem [shape: f32[1,128], index: 2, kind: input, shape index: {}]
  %s3 = inlined_call_operand.hbm [shape: bf16[16,128], index: 3, kind: output, shape index: {}]
  %s4 = sld [smem:[#allocation0]]
  $region26: #{tpu_custom_call.1} parent=0
    _
  %s6 = ssub.s32 1, %s4
  %s7 = scalar_select 0, %s6, %s4
  $region1: #{tpu_custom_call.1} parent=0
    #allocation2 [shape = 'u8[8192]{0}', space=vmem, size = 0x2000, scoped, tag = 'input window, operand 0, single buffered']
    #allocation3 [shape = 's32[1]{0}', space=sflag, size = 0x4, scoped, tag = 'scoped memory for tpu_custom_call.1']
    #allocation4 [shape = 's32[1]{0}', space=sflag, size = 0x4, scoped, tag = 'scoped memory for tpu_custom_call.1']
    #allocation5 [shape = 'u8[4096]{0}', space=vmem, size = 0x1000, scoped, tag = 'output window, operand 0, single buffered']
    %8 = vsyncpa [#allocation3], 0
    %9 = vsyncpa [#allocation4], 0
    // Predicated region
    $region2: #{tpu_custom_call.1} parent=1 // pred_check
      _
    $region3: #{tpu_custom_call.1} parent=1 // pred_check_branch
      %11 = sbr.rel (0) target = $region5
    $region4: #{tpu_custom_call.1} parent=1 // pred_region
      %s13 = ssub.s32 256, 256
      %14 = vsyncadd [#allocation3], %s13
      %s15 = sshll.u32 [#allocation2], 4
      %s16 = int_to_ptr.vmem [resolvable:$true] %s15
      %21 = dma.hbm_to_vmem [thread:$0]  %s0, 256, %s16, [#allocation3], 128, 128, 8
    $region5: #{tpu_custom_call.1} parent=1 // pred_fallthru
      _
    // Predicated region
    $region6: #{tpu_custom_call.1} parent=1 // pred_check
      _
    $region7: #{tpu_custom_call.1} parent=1 // pred_check_branch
      %23 = sbr.rel (0) target = $region9
    $region8: #{tpu_custom_call.1} parent=1 // pred_region
      _
    $region9: #{tpu_custom_call.1} parent=1 // pred_fallthru
      _
    // Predicated region
    $region10: #{tpu_custom_call.1} parent=1 // pred_check
      _
    $region11: #{tpu_custom_call.1} parent=1 // pred_check_branch
      %25 = sbr.rel (0) target = $region13
    $region12: #{tpu_custom_call.1} parent=1 // pred_region
      _
    $region13: #{tpu_custom_call.1} parent=1 // pred_fallthru
      _
    // Predicated region
    $region14: #{tpu_custom_call.1} parent=1 // pred_check
      _
    $region15: #{tpu_custom_call.1} parent=1 // pred_check_branch
      %27 = sbr.rel (0) target = $region17
    $region16: #{tpu_custom_call.1} parent=1 // pred_region
      %28 = dma.done [#allocation3], 256
    $region17: #{tpu_custom_call.1} parent=1 // pred_fallthru
      _
    %v29 = vld [vmem:[#allocation2] sm:$0xff]
    %v30 = vld [vmem:[#allocation2 + $0x8] sm:$0xff]
    %31 = vadd.xlane.f32.xlu0 %v29
    %v32 = vpop.xlane.xlu0 %31
    %33 = vadd.xlane.f32.xlu0 %v30
    %v34 = vpop.xlane.xlu0 %33
    %v35 = vrcp.pop 128.0
    %v36 = vmul.f32 %v32, %v35
    %v37 = vmul.f32 %v34, %v35
    %v38 = vsub.f32 %v29, %v36
    %v39 = vsub.f32 %v30, %v37
    %v40 = vmul.f32 %v38, %v38
    %v41 = vmul.f32 %v39, %v39
    %42 = vadd.xlane.f32.xlu0 %v40
    %v43 = vpop.xlane.xlu0 %42
    %44 = vadd.xlane.f32.xlu0 %v41
    %v45 = vpop.xlane.xlu0 %44
    %v46 = vmul.f32 %v43, %v35
    %v47 = vmul.f32 %v45, %v35
    %v48 = vadd.f32 %v46, 1e-12
    %v49 = vadd.f32 %v47, 1e-12
    %v50 = vrsqrt.pop %v48
    %v51 = vrsqrt.pop %v49
    %v52 = vmul.f32 %v38, %v50
    %v53 = vmul.f32 %v39, %v51
    %v54 = vld [vmem:[%s1] sm:$0x1]
    %v56 = vlaneseq
    %v57 = vshrl.u32 %v56, 7
    %v58 = vsub.s32 0, %v57
    %v59 = vrot.slane %v54, %v58
    %v61 = vmul.f32 %v52, %v59
    %v62 = vmul.f32 %v53, %v59
    %v63 = vld [vmem:[%s2] sm:$0x1]
    %v65 = vlaneseq
    %v66 = vshrl.u32 %v65, 7
    %v67 = vsub.s32 0, %v66
    %v68 = vrot.slane %v63, %v67
    %v70 = vadd.f32 %v61, %v68
    %v71 = vadd.f32 %v62, %v68
    %v72 = vpack.c.bf16 %v71, %v70
    %v74 = vunpack.c.l.b16 %v72
    %v75 = vunpack.c.h.b16 %v72
    %v76 = vpack.c.b16 %v74, %v74
    %v77 = vpack.c.b16 %v75, %v75
    %80 = vst [vmem:[#allocation5] sm:$0xf] %v76
    %81 = vst [vmem:[#allocation5 + $0x4] sm:$0xf] %v77
    // Predicated region
    $region18: #{tpu_custom_call.1} parent=1 // pred_check
      _
    $region19: #{tpu_custom_call.1} parent=1 // pred_check_branch
      %83 = sbr.rel (0) target = $region21
    $region20: #{tpu_custom_call.1} parent=1 // pred_region
      %s85 = ssub.s32 128, 128
      %86 = vsyncadd [#allocation4], %s85
      %s87 = sshll.u32 [#allocation5], 4
      %s88 = int_to_ptr.vmem [resolvable:$true] %s87
      %93 = dma.vmem_to_hbm [thread:$0]  %s88, 128, %s3, [#allocation4], 64, 64, 4
    $region21: #{tpu_custom_call.1} parent=1 // pred_fallthru
      _
    // Predicated region
    $region22: #{tpu_custom_call.1} parent=1 // pred_check
      _
    $region23: #{tpu_custom_call.1} parent=1 // pred_check_branch
      %95 = sbr.rel (0) target = $region25
    $region24: #{tpu_custom_call.1} parent=1 // pred_region
      %96 = dma.done [#allocation4], 128
    $region25: #{tpu_custom_call.1} parent=1 // pred_fallthru
      _
    %97 = vsyncpa [#allocation3], 1
    %98 = vsyncpa [#allocation4], 1

</llo_original>
